<compile_context>
chip_gen: v6e
topology: v6e:2x2x1
jax: 0.10.0
libtpu: 0.0.40
codegen_flags: <defaults>
</compile_context>

<pallas_src>
import functools
import math

import jax
import jax.numpy as jnp
from jax.experimental import pallas as pl
from jax.experimental.pallas import tpu as pltpu

N_ADAPT = 10.0   # the fixed `n` in AdaptiveActivation
LANE = 128       # TPU lane width
SUBLANE = 8      # TPU sublane width (f32)


def _round_up(n, m):
    return ((n + m - 1) // m) * m


def residual_block_kernel(a_ref, x_ref, w1_ref, b1_ref, w2_ref, b2_ref, o_ref):
    """One (TILE_B, Dp) batch tile of the fused residual block.

    a_ref  : SMEM (2,) f32        -> [a1, a2] adaptive-activation scales
    x_ref  : VMEM (TILE_B, Dp)    streamed activations (f32 or bf16)
    w1_ref : VMEM (Dp, Dp)        pre-transposed (in_dim x out_dim); VMEM-resident
    b1_ref : VMEM (1, Dp) f32
    w2_ref : VMEM (Dp, Dp)
    b2_ref : VMEM (1, Dp) f32
    o_ref  : VMEM (TILE_B, Dp)    output tile (same dtype as streamed x)
    """
    # Scalar adaptive scales, computed once per tile on the scalar unit.
    s1 = N_ADAPT * a_ref[0]
    s2 = N_ADAPT * a_ref[1]

    x_in = x_ref[...]                     # streamed dtype (bf16 halves HBM traffic)
    x_f32 = x_in.astype(jnp.float32)      # residual / tanh path stays f32

    # linear1 (MXU: bf16 operands, f32 accumulation) + adaptive tanh (EUP, f32)
    h = jnp.dot(x_in.astype(w1_ref.dtype), w1_ref[...],
                preferred_element_type=jnp.float32) + b1_ref[...]
    h = jnp.tanh(s1 * h)

    # linear2 + residual + adaptive tanh
    out = jnp.dot(h.astype(w2_ref.dtype), w2_ref[...],
                  preferred_element_type=jnp.float32) + b2_ref[...]
    out = out + x_f32
    o_ref[...] = jnp.tanh(s2 * out).astype(o_ref.dtype)


def prepare_residual_block_params(w1, b1, w2, b2, *, use_bf16=True):
    """Hoisted weight preprocessing: transpose to (in, out), cast, lane-pad.

    Call once and reuse across many residual_block_apply() calls so the transpose /
    cast / zero-pad HBM traffic is not re-paid on every forward.  Zero-padding of the
    *feature* dimension is numerically exact (padded rows/cols contribute 0 to dots).
    """
    D = w1.shape[0]
    Dp = _round_up(D, LANE)
    w_dtype = jnp.bfloat16 if use_bf16 else jnp.float32

    def pad_w(w):
        wt = w.T.astype(w_dtype)                       # (in, out)
        if D == Dp:
            return wt
        return jnp.zeros((Dp, Dp), w_dtype).at[:D, :D].set(wt)

    def pad_b(b):
        bf = b.astype(jnp.float32).reshape(1, D)
        if D == Dp:
            return bf
        return jnp.zeros((1, Dp), jnp.float32).at[:, :D].set(bf)

    return {"w1": pad_w(w1), "b1": pad_b(b1),
            "w2": pad_w(w2), "b2": pad_b(b2), "dim": D}


def _vmem_capacity_bytes():
    try:
        cap = int(pltpu.get_tpu_info().vmem_capacity_bytes)
        if cap > 0:
            return cap
    except Exception:  # pragma: no cover - conservative fallback
        pass
    return 64 * 1024 * 1024   # v7x per-TC capacity (smallest of the three)


def residual_block_apply(x, params, a, *, tile_b=None):
    """Fused ResidualBlock forward using pre-processed params.

    x : (B, D) f32 or bf16 activations (bf16 halves streamed HBM traffic; output
        is then stored bf16 directly by the kernel).
    """
    B, D = x.shape
    assert D == params["dim"], "dim mismatch between x and prepared params"
    w1, b1, w2, b2 = params["w1"], params["b1"], params["w2"], params["b2"]
    Dp = w1.shape[0]

    act_dtype = x.dtype                    # streamed activation dtype
    out_dtype = x.dtype                    # kernel stores in the same dtype
    act_bytes = jnp.dtype(act_dtype).itemsize
    out_bytes = jnp.dtype(out_dtype).itemsize
    w_bytes = jnp.dtype(w1.dtype).itemsize

    # ---- VMEM budgeting (generation-aware; v7x has only 64 MiB per TC) ----
    capacity = _vmem_capacity_bytes()
    budget = (capacity * 3) // 4                        # headroom for Mosaic scratch
    resident = 2 * Dp * Dp * w_bytes + 2 * Dp * 4       # single-buffered W1/W2/b1/b2
    per_row = 2 * Dp * (act_bytes + out_bytes)          # double-buffered x + out rows
    avail = budget - resident
    if avail < per_row * SUBLANE:
        # TODO(synk): K-tiled weight-streaming fallback for dims too large to keep both
        # weight matrices resident in VMEM (not needed for PINN-scale hidden dims).
        raise ValueError(
            f"ResidualBlock dim={D}: resident-weight plan needs {resident} B of VMEM "
            f"but budget is {budget} B on this chip.")

    # ---- tile_b: largest multiple of 8 that fits; keep multi-step grids even ----
    Bp8 = _round_up(B, SUBLANE)
    if tile_b is None:
        max_tile = min((avail // per_row) // SUBLANE * SUBLANE, 2048)
        tile_b = min(Bp8, max(max_tile, SUBLANE))
        n_tiles = pl.cdiv(Bp8, tile_b)
        if n_tiles > 1 and n_tiles % 2 == 1:            # balance the two v7x TCs
            tile_b = _round_up(pl.cdiv(Bp8, n_tiles + 1), SUBLANE)
    tile_b = max(SUBLANE, _round_up(min(int(tile_b), Bp8), SUBLANE))
    Bp = _round_up(B, tile_b)
    grid = (Bp // tile_b,)

    vmem_needed = resident + tile_b * per_row + (512 << 10)
    vmem_limit = int(min(max(vmem_needed * 5 // 4, 32 * 1024 * 1024), budget))

    # ---- pad only when genuinely unaligned (pad + slice are extra HBM passes) ----
    needs_pad = (B, D) != (Bp, Dp)
    if needs_pad:
        # NOTE: padded *batch* rows do not stay zero through the block (tanh(s*b1) != 0);
        # they are dead work that we slice off below, hence pad only when unavoidable.
        x_in = jnp.zeros((Bp, Dp), act_dtype).at[:B, :D].set(x)
    else:
        x_in = x
    a_f32 = a.astype(jnp.float32).reshape(2)

    def build_in_specs(resident_mode):
        def rspec(shape):
            if resident_mode is None:
                return pl.BlockSpec(shape, lambda i: (0, 0))
            return pl.BlockSpec(shape, lambda i: (0, 0), pipeline_mode=resident_mode)
        return [
            pl.BlockSpec(memory_space=pltpu.SMEM),           # a1, a2 scalars
            pl.BlockSpec((tile_b, Dp), lambda i: (i, 0)),    # x tile (streamed)
            rspec((Dp, Dp)),                                 # W1^T (VMEM-resident)
            rspec((1, Dp)),                                  # b1
            rspec((Dp, Dp)),                                 # W2^T
            rspec((1, Dp)),                                  # b2
        ]

    out_p = None
    last_err = None
    # Prefer single-buffered resident weights; fall back to default buffering if the
    # runtime rejects Buffered(1).
    for resident_mode in (pl.Buffered(1), None):
        try:
            grid_spec = pltpu.PrefetchScalarGridSpec(
                num_scalar_prefetch=0,
                grid=grid,
                in_specs=build_in_specs(resident_mode),
                out_specs=pl.BlockSpec((tile_b, Dp), lambda i: (i, 0)),
            )
            out_p = pl.pallas_call(
                residual_block_kernel,
                out_shape=jax.ShapeDtypeStruct((Bp, Dp), out_dtype),
                grid_spec=grid_spec,
                compiler_params=pltpu.CompilerParams(
                    dimension_semantics=("parallel",),   # batch tiles are independent
                    vmem_limit_bytes=vmem_limit,
                ),
            )(a_f32, x_in, w1, b1, w2, b2)
            break
        except Exception as e:  # pragma: no cover - fallback path
            last_err = e
            out_p = None
    if out_p is None:
        raise last_err

    if needs_pad:
        out_p = out_p[:B, :D]
    return out_p


def residual_block(x, w1, b1, w2, b2, a, *, use_bf16=True, tile_b=None):
    """One-shot convenience wrapper (re-prepares weights every call).

    For repeated calls with fixed weights, call prepare_residual_block_params() once
    and reuse it with residual_block_apply().
    """
    params = prepare_residual_block_params(w1, b1, w2, b2, use_bf16=use_bf16)
    return residual_block_apply(x, params, a, tile_b=tile_b)


# ----------------------------- references (testing) -----------------------------

def residual_block_ref(x, w1, b1, w2, b2, a):
    """Pure-f32 JAX reference mirroring the PyTorch forward."""
    dot = functools.partial(jnp.dot, precision=jax.lax.Precision.HIGHEST)
    h = jnp.tanh(N_ADAPT * a[0] * (dot(x, w1.T) + b1))
    out = (dot(h, w2.T) + b2) + x
    return jnp.tanh(N_ADAPT * a[1] * out)


def residual_block_ref_bf16(x, w1, b1, w2, b2, a):
    """Reference with the kernel's bf16-operand / f32-accumulation numerics
    for f32-streamed activations (residual path stays f32)."""
    s1 = N_ADAPT * a[0]
    s2 = N_ADAPT * a[1]
    h = jnp.dot(x.astype(jnp.bfloat16), w1.T.astype(jnp.bfloat16),
                preferred_element_type=jnp.float32) + b1
    h = jnp.tanh(s1 * h)
    out = jnp.dot(h.astype(jnp.bfloat16), w2.T.astype(jnp.bfloat16),
                  preferred_element_type=jnp.float32) + b2
    out = out + x
    return jnp.tanh(s2 * out)


if __name__ == "__main__":
    key = jax.random.PRNGKey(0)

    # Small shape consistent with the module (batch=8, hidden dim=32), plus a larger
    # aligned case (batch=512, dim=256) that exercises the pad-free path, resident
    # weights, and bf16 activation streaming.
    for (B, D) in [(8, 32), (512, 256)]:
        key, k_x, k_w1, k_b1, k_w2, k_b2 = jax.random.split(key, 6)
        bound = 1.0 / math.sqrt(D)
        x = jax.random.normal(k_x, (B, D), dtype=jnp.float32)
        w1 = jax.random.uniform(k_w1, (D, D), jnp.float32, -bound, bound)  # (out, in)
        b1 = jax.random.uniform(k_b1, (D,), jnp.float32, -bound, bound)
        w2 = jax.random.uniform(k_w2, (D, D), jnp.float32, -bound, bound)
        b2 = jax.random.uniform(k_b2, (D,), jnp.float32, -bound, bound)
        a = jnp.ones((2,), dtype=jnp.float32)  # [a1, a2] = torch.ones(1) each

        ref_f32 = residual_block_ref(x, w1, b1, w2, b2, a)

        # bf16 MXU fast path (default on v5e/v6e/v7x): prepare weights once, reuse.
        params = prepare_residual_block_params(w1, b1, w2, b2, use_bf16=True)
        out_bf16 = jax.block_until_ready(residual_block_apply(x, params, a))
        assert out_bf16.shape == (B, D) and out_bf16.dtype == x.dtype
        ref_bf16 = residual_block_ref_bf16(x, w1, b1, w2, b2, a)
        assert jnp.allclose(out_bf16, ref_bf16, atol=2e-3, rtol=2e-3), \
            f"bf16 path mismatch (B={B}, D={D})"
        assert float(jnp.max(jnp.abs(out_bf16 - ref_f32))) < 0.1

        # bf16 activation streaming (aligned shapes only): half the x/out HBM traffic,
        # bf16 stores straight from the kernel.
        if D % LANE == 0 and B % SUBLANE == 0:
            x_bf = x.astype(jnp.bfloat16)
            out_act_bf = jax.block_until_ready(residual_block_apply(x_bf, params, a))
            assert out_act_bf.shape == (B, D) and out_act_bf.dtype == jnp.bfloat16
            diff = jnp.abs(out_act_bf.astype(jnp.float32) - ref_f32)
            assert float(jnp.max(diff)) < 0.25 and float(jnp.mean(diff)) < 0.05, \
                f"bf16-activation path mismatch (B={B}, D={D})"

        # f32-operand accuracy escape hatch (not the preferred path on any generation).
        out_f32 = jax.block_until_ready(
            residual_block(x, w1, b1, w2, b2, a, use_bf16=False))
        assert jnp.allclose(out_f32, ref_f32, atol=5e-4, rtol=5e-4), \
            f"f32 path mismatch (B={B}, D={D})"

    print("KERNEL_OK")
</pallas_src>

<mosaic_0001>
module attributes {stable_mosaic.version = 11 : i64} {
  func.func @residual_block_kernel(%arg0: i32, %arg1: memref<2xf32, #tpu.memory_space<smem>>, %arg2: memref<8x128xf32, #tpu.memory_space<vmem>>, %arg3: memref<128x128xbf16, #tpu.memory_space<vmem>>, %arg4: memref<1x128xf32, #tpu.memory_space<vmem>>, %arg5: memref<128x128xbf16, #tpu.memory_space<vmem>>, %arg6: memref<1x128xf32, #tpu.memory_space<vmem>>, %arg7: memref<8x128xf32, #tpu.memory_space<vmem>>) attributes {dimension_semantics = [#tpu.dimension_semantics<parallel>], iteration_bounds = array<i64: 1>, scalar_prefetch = 0 : i64, scratch_operands = 0 : i64, tpu.core_type = #tpu.core_type<tc>, window_params = [{transform_indices = @transform_0, window_bounds = array<i64: 2>}, {transform_indices = @transform_1, window_bounds = array<i64: 8, 128>}, {pipeline_mode = #tpu.pipeline_mode<synchronous>, transform_indices = @transform_2, window_bounds = array<i64: 128, 128>}, {pipeline_mode = #tpu.pipeline_mode<synchronous>, transform_indices = @transform_3, window_bounds = array<i64: 1, 128>}, {pipeline_mode = #tpu.pipeline_mode<synchronous>, transform_indices = @transform_4, window_bounds = array<i64: 128, 128>}, {pipeline_mode = #tpu.pipeline_mode<synchronous>, transform_indices = @transform_5, window_bounds = array<i64: 1, 128>}, {transform_indices = @transform_6, window_bounds = array<i64: 8, 128>}]} {
    %c0 = arith.constant 0 : index
    %0 = memref.load %arg1[%c0] : memref<2xf32, #tpu.memory_space<smem>>
    %cst = arith.constant 1.000000e+01 : f32
    %1 = arith.mulf %cst, %0 : f32
    %c1 = arith.constant 1 : index
    %2 = memref.load %arg1[%c1] : memref<2xf32, #tpu.memory_space<smem>>
    %cst_0 = arith.constant 1.000000e+01 : f32
    %3 = arith.mulf %cst_0, %2 : f32
    %c0_1 = arith.constant 0 : index
    %c0_2 = arith.constant 0 : index
    %4 = vector.load %arg2[%c0_1, %c0_2] : memref<8x128xf32, #tpu.memory_space<vmem>>, vector<8x128xf32>
    %5 = arith.truncf %4 : vector<8x128xf32> to vector<8x128xbf16>
    %c0_3 = arith.constant 0 : index
    %c0_4 = arith.constant 0 : index
    %6 = vector.load %arg3[%c0_3, %c0_4] : memref<128x128xbf16, #tpu.memory_space<vmem>>, vector<128x128xbf16>
    %cst_5 = arith.constant dense<0.000000e+00> : vector<8x128xf32>
    %7 = tpu.matmul %5, %6, %cst_5 {dimension_numbers = #tpu.dot_dimension_numbers<[1], [0], [0], [1], [0, 0, 1, 1], [], []>} : vector<8x128xbf16>, vector<128x128xbf16>, vector<8x128xf32> -> vector<8x128xf32>
    %c0_6 = arith.constant 0 : index
    %c0_7 = arith.constant 0 : index
    %8 = vector.load %arg4[%c0_6, %c0_7] : memref<1x128xf32, #tpu.memory_space<vmem>>, vector<1x128xf32>
    %9 = vector.broadcast %8 : vector<1x128xf32> to vector<8x128xf32>
    %10 = arith.addf %7, %9 : vector<8x128xf32>
    %11 = vector.broadcast %1 : f32 to vector<8x128xf32>
    %12 = arith.mulf %11, %10 : vector<8x128xf32>
    %13 = math.tanh %12 : vector<8x128xf32>
    %14 = arith.truncf %13 : vector<8x128xf32> to vector<8x128xbf16>
    %c0_8 = arith.constant 0 : index
    %c0_9 = arith.constant 0 : index
    %15 = vector.load %arg5[%c0_8, %c0_9] : memref<128x128xbf16, #tpu.memory_space<vmem>>, vector<128x128xbf16>
    %cst_10 = arith.constant dense<0.000000e+00> : vector<8x128xf32>
    %16 = tpu.matmul %14, %15, %cst_10 {dimension_numbers = #tpu.dot_dimension_numbers<[1], [0], [0], [1], [0, 0, 1, 1], [], []>} : vector<8x128xbf16>, vector<128x128xbf16>, vector<8x128xf32> -> vector<8x128xf32>
    %c0_11 = arith.constant 0 : index
    %c0_12 = arith.constant 0 : index
    %17 = vector.load %arg6[%c0_11, %c0_12] : memref<1x128xf32, #tpu.memory_space<vmem>>, vector<1x128xf32>
    %18 = vector.broadcast %17 : vector<1x128xf32> to vector<8x128xf32>
    %19 = arith.addf %16, %18 : vector<8x128xf32>
    %20 = arith.addf %19, %4 : vector<8x128xf32>
    %21 = vector.broadcast %3 : f32 to vector<8x128xf32>
    %22 = arith.mulf %21, %20 : vector<8x128xf32>
    %23 = math.tanh %22 : vector<8x128xf32>
    %c0_13 = arith.constant 0 : index
    %c0_14 = arith.constant 0 : index
    %24 = vector.load %arg7[%c0_13, %c0_14] : memref<8x128xf32, #tpu.memory_space<vmem>>, vector<8x128xf32>
    tpu.vector_store %arg7[%c0_13, %c0_14], %23 {strides = array<i32>} : memref<8x128xf32, #tpu.memory_space<vmem>>, vector<8x128xf32>,
    return
  }
  func.func @transform_0(%arg0: i32) -> i32 {
    %c0_i32 = arith.constant 0 : i32
    %c0_i32_0 = arith.constant 0 : i32
    return %c0_i32 : i32
  }
  func.func @transform_1(%arg0: i32) -> (i32, i32) {
    %c0_i32 = arith.constant 0 : i32
    %c0_i32_0 = arith.constant 0 : i32
    return %arg0, %c0_i32 : i32, i32
  }
  func.func @transform_2(%arg0: i32) -> (i32, i32) {
    %c0_i32 = arith.constant 0 : i32
    %c0_i32_0 = arith.constant 0 : i32
    %c0_i32_1 = arith.constant 0 : i32
    return %c0_i32, %c0_i32_0 : i32, i32
  }
  func.func @transform_3(%arg0: i32) -> (i32, i32) {
    %c0_i32 = arith.constant 0 : i32
    %c0_i32_0 = arith.constant 0 : i32
    %c0_i32_1 = arith.constant 0 : i32
    return %c0_i32, %c0_i32_0 : i32, i32
  }
  func.func @transform_4(%arg0: i32) -> (i32, i32) {
    %c0_i32 = arith.constant 0 : i32
    %c0_i32_0 = arith.constant 0 : i32
    %c0_i32_1 = arith.constant 0 : i32
    return %c0_i32, %c0_i32_0 : i32, i32
  }
  func.func @transform_5(%arg0: i32) -> (i32, i32) {
    %c0_i32 = arith.constant 0 : i32
    %c0_i32_0 = arith.constant 0 : i32
    %c0_i32_1 = arith.constant 0 : i32
    return %c0_i32, %c0_i32_0 : i32, i32
  }
  func.func @transform_6(%arg0: i32) -> (i32, i32) {
    %c0_i32 = arith.constant 0 : i32
    %c0_i32_0 = arith.constant 0 : i32
    return %arg0, %c0_i32 : i32, i32
  }
}

module attributes {stable_mosaic.version = 11 : i64} {
  func.func @residual_block_kernel(%arg0: i32, %arg1: memref<2xf32, #tpu.memory_space<smem>>, %arg2: memref<8x128xf32, #tpu.memory_space<vmem>>, %arg3: memref<128x128xbf16, #tpu.memory_space<vmem>>, %arg4: memref<1x128xf32, #tpu.memory_space<vmem>>, %arg5: memref<128x128xbf16, #tpu.memory_space<vmem>>, %arg6: memref<1x128xf32, #tpu.memory_space<vmem>>, %arg7: memref<8x128xf32, #tpu.memory_space<vmem>>) attributes {dimension_semantics = [#tpu.dimension_semantics<parallel>], iteration_bounds = array<i64: 1>, scalar_prefetch = 0 : i64, scratch_operands = 0 : i64, tpu.core_type = #tpu.core_type<tc>, window_params = [{transform_indices = @transform_0, window_bounds = array<i64: 2>}, {transform_indices = @transform_1, window_bounds = array<i64: 8, 128>}, {pipeline_mode = #tpu.pipeline_mode<synchronous>, transform_indices = @transform_2, window_bounds = array<i64: 128, 128>}, {pipeline_mode = #tpu.pipeline_mode<synchronous>, transform_indices = @transform_3, window_bounds = array<i64: 1, 128>}, {pipeline_mode = #tpu.pipeline_mode<synchronous>, transform_indices = @transform_4, window_bounds = array<i64: 128, 128>}, {pipeline_mode = #tpu.pipeline_mode<synchronous>, transform_indices = @transform_5, window_bounds = array<i64: 1, 128>}, {transform_indices = @transform_6, window_bounds = array<i64: 8, 128>}]} {
    %c0 = arith.constant 0 : index
    %0 = memref.load %arg1[%c0] : memref<2xf32, #tpu.memory_space<smem>>
    %cst = arith.constant 1.000000e+01 : f32
    %1 = arith.mulf %cst, %0 : f32
    %c1 = arith.constant 1 : index
    %2 = memref.load %arg1[%c1] : memref<2xf32, #tpu.memory_space<smem>>
    %cst_0 = arith.constant 1.000000e+01 : f32
    %3 = arith.mulf %cst_0, %2 : f32
    %c0_1 = arith.constant 0 : index
    %c0_2 = arith.constant 0 : index
    %4 = vector.load %arg2[%c0_1, %c0_2] : memref<8x128xf32, #tpu.memory_space<vmem>>, vector<8x128xf32>
    %5 = arith.truncf %4 : vector<8x128xf32> to vector<8x128xbf16>
    %c0_3 = arith.constant 0 : index
    %c0_4 = arith.constant 0 : index
    %6 = vector.load %arg3[%c0_3, %c0_4] : memref<128x128xbf16, #tpu.memory_space<vmem>>, vector<128x128xbf16>
    %cst_5 = arith.constant dense<0.000000e+00> : vector<8x128xf32>
    %7 = tpu.matmul %5, %6, %cst_5 {dimension_numbers = #tpu.dot_dimension_numbers<[1], [0], [0], [1], [0, 0, 1, 1], [], []>} : vector<8x128xbf16>, vector<128x128xbf16>, vector<8x128xf32> -> vector<8x128xf32>
    %c0_6 = arith.constant 0 : index
    %c0_7 = arith.constant 0 : index
    %8 = vector.load %arg4[%c0_6, %c0_7] : memref<1x128xf32, #tpu.memory_space<vmem>>, vector<1x128xf32>
    %9 = vector.broadcast %8 : vector<1x128xf32> to vector<8x128xf32>
    %10 = arith.addf %7, %9 : vector<8x128xf32>
    %11 = vector.broadcast %1 : f32 to vector<8x128xf32>
    %12 = arith.mulf %11, %10 : vector<8x128xf32>
    %13 = math.tanh %12 : vector<8x128xf32>
    %14 = arith.truncf %13 : vector<8x128xf32> to vector<8x128xbf16>
    %c0_8 = arith.constant 0 : index
    %c0_9 = arith.constant 0 : index
    %15 = vector.load %arg5[%c0_8, %c0_9] : memref<128x128xbf16, #tpu.memory_space<vmem>>, vector<128x128xbf16>
    %cst_10 = arith.constant dense<0.000000e+00> : vector<8x128xf32>
    %16 = tpu.matmul %14, %15, %cst_10 {dimension_numbers = #tpu.dot_dimension_numbers<[1], [0], [0], [1], [0, 0, 1, 1], [], []>} : vector<8x128xbf16>, vector<128x128xbf16>, vector<8x128xf32> -> vector<8x128xf32>
    %c0_11 = arith.constant 0 : index
    %c0_12 = arith.constant 0 : index
    %17 = vector.load %arg6[%c0_11, %c0_12] : memref<1x128xf32, #tpu.memory_space<vmem>>, vector<1x128xf32>
    %18 = vector.broadcast %17 : vector<1x128xf32> to vector<8x128xf32>
    %19 = arith.addf %16, %18 : vector<8x128xf32>
    %20 = arith.addf %19, %4 : vector<8x128xf32>
    %21 = vector.broadcast %3 : f32 to vector<8x128xf32>
    %22 = arith.mulf %21, %20 : vector<8x128xf32>
    %23 = math.tanh %22 : vector<8x128xf32>
    %c0_13 = arith.constant 0 : index
    %c0_14 = arith.constant 0 : index
    %24 = vector.load %arg7[%c0_13, %c0_14] : memref<8x128xf32, #tpu.memory_space<vmem>>, vector<8x128xf32>
    tpu.vector_store %arg7[%c0_13, %c0_14], %23 {strides = array<i32>} : memref<8x128xf32, #tpu.memory_space<vmem>>, vector<8x128xf32>,
    return
  }
  func.func @transform_0(%arg0: i32) -> i32 {
    %c0_i32 = arith.constant 0 : i32
    %c0_i32_0 = arith.constant 0 : i32
    return %c0_i32 : i32
  }
  func.func @transform_1(%arg0: i32) -> (i32, i32) {
    %c0_i32 = arith.constant 0 : i32
    %c0_i32_0 = arith.constant 0 : i32
    return %arg0, %c0_i32 : i32, i32
  }
  func.func @transform_2(%arg0: i32) -> (i32, i32) {
    %c0_i32 = arith.constant 0 : i32
    %c0_i32_0 = arith.constant 0 : i32
    %c0_i32_1 = arith.constant 0 : i32
    return %c0_i32, %c0_i32_0 : i32, i32
  }
  func.func @transform_3(%arg0: i32) -> (i32, i32) {
    %c0_i32 = arith.constant 0 : i32
    %c0_i32_0 = arith.constant 0 : i32
    %c0_i32_1 = arith.constant 0 : i32
    return %c0_i32, %c0_i32_0 : i32, i32
  }
  func.func @transform_4(%arg0: i32) -> (i32, i32) {
    %c0_i32 = arith.constant 0 : i32
    %c0_i32_0 = arith.constant 0 : i32
    %c0_i32_1 = arith.constant 0 : i32
    return %c0_i32, %c0_i32_0 : i32, i32
  }
  func.func @transform_5(%arg0: i32) -> (i32, i32) {
    %c0_i32 = arith.constant 0 : i32
    %c0_i32_0 = arith.constant 0 : i32
    %c0_i32_1 = arith.constant 0 : i32
    return %c0_i32, %c0_i32_0 : i32, i32
  }
  func.func @transform_6(%arg0: i32) -> (i32, i32) {
    %c0_i32 = arith.constant 0 : i32
    %c0_i32_0 = arith.constant 0 : i32
    return %arg0, %c0_i32 : i32, i32
  }
}

</mosaic_0001>

<llo_original>
// kernel: tpu_custom_call.1
$region0: #{tpu_custom_call.1}
  #allocation0 [shape = 'u32[]', space=smem, size = 0x4, offset = 0x4, fixed_abs, tag = 'smem constant byte address 0x4 - core index']
  #allocation1 [shape = 'u32[144,128]{1,0:T(1,128)}', space=vmem, size = 0x12000, scoped, tag = 'internal scratch']
  %s0 = inlined_call_operand.hbm [shape: f32[2], index: 0, kind: input, shape index: {}]
  %s1 = inlined_call_operand.hbm [shape: f32[8,128], index: 1, kind: input, shape index: {}]
  %s2 = inlined_call_operand.hbm [shape: bf16[128,128], index: 2, kind: input, shape index: {}]
  %s3 = inlined_call_operand.vmem [shape: f32[1,128], index: 3, kind: input, shape index: {}]
  %s4 = inlined_call_operand.hbm [shape: bf16[128,128], index: 4, kind: input, shape index: {}]
  %s5 = inlined_call_operand.vmem [shape: f32[1,128], index: 5, kind: input, shape index: {}]
  %s6 = inlined_call_operand.hbm [shape: f32[8,128], index: 6, kind: output, shape index: {}]
  %s7 = sld [smem:[#allocation0]]
  $region50: #{tpu_custom_call.1} parent=0
    _
  %s9 = ssub.s32 1, %s7
  %s10 = scalar_select 0, %s9, %s7
  $region1: #{tpu_custom_call.1} parent=0
    #allocation2 [shape = 'u8[512]{0}', space=smem, size = 0x200, scoped, tag = 'input window, operand 0, single buffered']
    #allocation3 [shape = 's32[1]{0}', space=sflag, size = 0x4, scoped, tag = 'scoped memory for tpu_custom_call.1']
    #allocation4 [shape = 's32[1]{0}', space=sflag, size = 0x4, scoped, tag = 'scoped memory for tpu_custom_call.1']
    #allocation5 [shape = 's32[1]{0}', space=sflag, size = 0x4, scoped, tag = 'scoped memory for tpu_custom_call.1']
    #allocation6 [shape = 'u8[4096]{0}', space=vmem, size = 0x1000, scoped, tag = 'input window, operand 1, single buffered']
    #allocation7 [shape = 'u8[32768]{0}', space=vmem, size = 0x8000, scoped, tag = 'input window, operand 2, single buffered']
    #allocation8 [shape = 's32[1]{0}', space=sflag, size = 0x4, scoped, tag = 'scoped memory for tpu_custom_call.1']
    #allocation9 [shape = 'u8[32768]{0}', space=vmem, size = 0x8000, scoped, tag = 'input window, operand 4, single buffered']
    #allocation10 [shape = 'u8[4096]{0}', space=vmem, size = 0x1000, scoped, tag = 'output window, operand 0, single buffered']
    %11 = vsyncpa [#allocation5], 0
    %12 = vsyncpa [#allocation3], 0
    %13 = vsyncpa [#allocation8], 0
    %14 = vsyncpa [#allocation4], 0
    // Predicated region
    $region2: #{tpu_custom_call.1} parent=1 // pred_check
      _
    $region3: #{tpu_custom_call.1} parent=1 // pred_check_branch
      %16 = sbr.rel (0) target = $region5
    $region4: #{tpu_custom_call.1} parent=1 // pred_region
      %s18 = ssub.s32 16, 16
      %19 = vsyncadd [#allocation5], %s18
      %22 = dma.hbm_to_smem %s0, 16, [#allocation2], [#allocation5]
    $region5: #{tpu_custom_call.1} parent=1 // pred_fallthru
      _
    // Predicated region
    $region6: #{tpu_custom_call.1} parent=1 // pred_check
      _
    $region7: #{tpu_custom_call.1} parent=1 // pred_check_branch
      %24 = sbr.rel (0) target = $region9
    $region8: #{tpu_custom_call.1} parent=1 // pred_region
      %s26 = ssub.s32 128, 128
      %27 = vsyncadd [#allocation3], %s26
      %s29 = sshll.u32 [#allocation6], 4
      %s30 = int_to_ptr.vmem [resolvable:$true] %s29
      %32 = dma.hbm_to_vmem [thread:$0]  %s1, 128, %s30, [#allocation3]
    $region9: #{tpu_custom_call.1} parent=1 // pred_fallthru
      _
    // Predicated region
    $region10: #{tpu_custom_call.1} parent=1 // pred_check
      _
    $region11: #{tpu_custom_call.1} parent=1 // pred_check_branch
      %34 = sbr.rel (0) target = $region13
    $region12: #{tpu_custom_call.1} parent=1 // pred_region
      %s36 = ssub.s32 1024, 1024
      %37 = vsyncadd [#allocation8], %s36
      %s38 = sshll.u32 [#allocation7], 4
      %s39 = int_to_ptr.vmem [resolvable:$true] %s38
      %44 = dma.hbm_to_vmem [thread:$0]  %s2, 1024, %s39, [#allocation8], 64, 64, 4
    $region13: #{tpu_custom_call.1} parent=1 // pred_fallthru
      _
    // Predicated region
    $region14: #{tpu_custom_call.1} parent=1 // pred_check
      _
    $region15: #{tpu_custom_call.1} parent=1 // pred_check_branch
      %46 = sbr.rel (0) target = $region17
    $region16: #{tpu_custom_call.1} parent=1 // pred_region
      _
    $region17: #{tpu_custom_call.1} parent=1 // pred_fallthru
      _
    // Predicated region
    $region18: #{tpu_custom_call.1} parent=1 // pred_check
      _
    $region19: #{tpu_custom_call.1} parent=1 // pred_check_branch
      %48 = sbr.rel (0) target = $region21
    $region20: #{tpu_custom_call.1} parent=1 // pred_region
      %s50 = ssub.s32 1024, 1024
      %51 = vsyncadd [#allocation8], %s50
      %s52 = sshll.u32 [#allocation9], 4
      %s53 = int_to_ptr.vmem [resolvable:$true] %s52
      %58 = dma.hbm_to_vmem [thread:$0]  %s4, 1024, %s53, [#allocation8], 64, 64, 4
    $region21: #{tpu_custom_call.1} parent=1 // pred_fallthru
      _
    // Predicated region
    $region22: #{tpu_custom_call.1} parent=1 // pred_check
      _
    $region23: #{tpu_custom_call.1} parent=1 // pred_check_branch
      %60 = sbr.rel (0) target = $region25
    $region24: #{tpu_custom_call.1} parent=1 // pred_region
      _
    $region25: #{tpu_custom_call.1} parent=1 // pred_fallthru
      _
    // Predicated region
    $region26: #{tpu_custom_call.1} parent=1 // pred_check
      _
    $region27: #{tpu_custom_call.1} parent=1 // pred_check_branch
      %62 = sbr.rel (0) target = $region29
    $region28: #{tpu_custom_call.1} parent=1 // pred_region
      %63 = dma.done [#allocation5], 16
    $region29: #{tpu_custom_call.1} parent=1 // pred_fallthru
      _
    // Predicated region
    $region30: #{tpu_custom_call.1} parent=1 // pred_check
      _
    $region31: #{tpu_custom_call.1} parent=1 // pred_check_branch
      %65 = sbr.rel (0) target = $region33
    $region32: #{tpu_custom_call.1} parent=1 // pred_region
      %66 = dma.done [#allocation3], 128
    $region33: #{tpu_custom_call.1} parent=1 // pred_fallthru
      _
    // Predicated region
    $region34: #{tpu_custom_call.1} parent=1 // pred_check
      _
    $region35: #{tpu_custom_call.1} parent=1 // pred_check_branch
      %68 = sbr.rel (0) target = $region37
    $region36: #{tpu_custom_call.1} parent=1 // pred_region
      %69 = dma.done [#allocation8], 1024
    $region37: #{tpu_custom_call.1} parent=1 // pred_fallthru
      _
    // Predicated region
    $region38: #{tpu_custom_call.1} parent=1 // pred_check
      _
    $region39: #{tpu_custom_call.1} parent=1 // pred_check_branch
      %71 = sbr.rel (0) target = $region41
    $region40: #{tpu_custom_call.1} parent=1 // pred_region
      %72 = dma.done [#allocation8], 1024
    $region41: #{tpu_custom_call.1} parent=1 // pred_fallthru
      _
    %73 = sfence
    %s75 = sld [smem:[#allocation2]]
    %s76 = smul.f32 %s75, 10.0
    %s77 = sld [smem:[#allocation2 + $0x1]]
    %s78 = smul.f32 %s77, 10.0
    %v79 = vld [vmem:[#allocation6] sm:$0xff]
    %v80 = vpack.c.bf16 %v79, %v79
    %v81 = vld [vmem:[#allocation7] sm:$0xf]
    %v82 = vld [vmem:[#allocation7 + $0x4] sm:$0xf]
    %v83 = vld [vmem:[#allocation7 + $0x8] sm:$0xf]
    %v84 = vld [vmem:[#allocation7 + $0xc] sm:$0xf]
    %v85 = vld [vmem:[#allocation7 + $0x10] sm:$0xf]
    %v86 = vld [vmem:[#allocation7 + $0x14] sm:$0xf]
    %v87 = vld [vmem:[#allocation7 + $0x18] sm:$0xf]
    %v88 = vld [vmem:[#allocation7 + $0x1c] sm:$0xf]
    %v89 = vld [vmem:[#allocation7 + $0x20] sm:$0xf]
    %v90 = vld [vmem:[#allocation7 + $0x24] sm:$0xf]
    %v91 = vld [vmem:[#allocation7 + $0x28] sm:$0xf]
    %v92 = vld [vmem:[#allocation7 + $0x2c] sm:$0xf]
    %v93 = vld [vmem:[#allocation7 + $0x30] sm:$0xf]
    %v94 = vld [vmem:[#allocation7 + $0x34] sm:$0xf]
    %v95 = vld [vmem:[#allocation7 + $0x38] sm:$0xf]
    %v96 = vld [vmem:[#allocation7 + $0x3c] sm:$0xf]
    %v97 = vld [vmem:[%s3] sm:$0x1]
    %v99 = vlaneseq
    %v100 = vshrl.u32 %v99, 7
    %v101 = vsub.s32 0, %v100
    %v102 = vrot.slane %v97, %v101
    %v120 = vunpack.c.l.b16 %v81
    %v121 = vunpack.c.l.b16 %v82
    %v122 = vunpack.c.l.b16 %v83
    %v123 = vunpack.c.l.b16 %v84
    %v124 = vunpack.c.l.b16 %v85
    %v125 = vunpack.c.l.b16 %v86
    %v126 = vunpack.c.l.b16 %v87
    %v127 = vunpack.c.l.b16 %v88
    %v128 = vunpack.c.l.b16 %v89
    %v129 = vunpack.c.l.b16 %v90
    %v130 = vunpack.c.l.b16 %v91
    %v131 = vunpack.c.l.b16 %v92
    %v132 = vunpack.c.l.b16 %v93
    %v133 = vunpack.c.l.b16 %v94
    %v134 = vunpack.c.l.b16 %v95
    %v135 = vunpack.c.l.b16 %v96
    %v136 = vpack.c.b16 %v121, %v120
    %v137 = vpack.c.b16 %v123, %v122
    %v138 = vpack.c.b16 %v125, %v124
    %v139 = vpack.c.b16 %v127, %v126
    %v140 = vpack.c.b16 %v129, %v128
    %v141 = vpack.c.b16 %v131, %v130
    %v142 = vpack.c.b16 %v133, %v132
    %v143 = vpack.c.b16 %v135, %v134
    %152 = vmatprep.subr.bf16.mxu0 0
    %153 = vmatpush1.bf16.msra.mxu0 %v143
    %154 = vmatprep.subr.bf16.mxu0 0
    %155 = vmatpush1.bf16.msra.mxu0 %v142
    %156 = vmatprep.subr.bf16.mxu0 0
    %157 = vmatpush1.bf16.msra.mxu0 %v141
    %158 = vmatprep.subr.bf16.mxu0 0
    %159 = vmatpush1.bf16.msra.mxu0 %v140
    %160 = vmatprep.subr.bf16.mxu0 0
    %161 = vmatpush1.bf16.msra.mxu0 %v139
    %162 = vmatprep.subr.bf16.mxu0 0
    %163 = vmatpush1.bf16.msra.mxu0 %v138
    %164 = vmatprep.subr.bf16.mxu0 0
    %165 = vmatpush1.bf16.msra.mxu0 %v137
    %166 = vmatprep.subr.bf16.mxu0 0
    %167 = vmatpush1.bf16.msra.mxu0 %v136
    %168 = vmatprep.subr.bf16.mxu0 0
    %169 = vmatpush2.bf16.msra.mxu0 0
    %170 = vmatprep.subr.bf16.mxu0 0
    %171 = vmatpush2.bf16.msra.mxu0 0
    %172 = vmatprep.subr.bf16.mxu0 0
    %173 = vmatpush2.bf16.msra.mxu0 0
    %174 = vmatprep.subr.bf16.mxu0 0
    %175 = vmatpush2.bf16.msra.mxu0 0
    %176 = vmatprep.subr.bf16.mxu0 0
    %177 = vmatpush2.bf16.msra.mxu0 0
    %178 = vmatprep.subr.bf16.mxu0 0
    %179 = vmatpush2.bf16.msra.mxu0 0
    %180 = vmatprep.subr.bf16.mxu0 0
    %181 = vmatpush2.bf16.msra.mxu0 0
    %182 = vmatprep.subr.bf16.mxu0 0
    %183 = vmatpush2.bf16.msra.mxu0 0
    %184 = vmatprep.mubr.bf16.mxu0 0
    %185 = vmatmul.mubr.bf16.gmra.mxu0 %v80
    %v186 = vpop.f32.mrf.mxu0
    %v187 = vadd.f32 %v102, %v186
    %v188 = vpop.f32.mrf.mxu0
    %v189 = vpop.f32.mrf.mxu0
    %v190 = vpop.f32.mrf.mxu0
    %191 = vdwg.mxu0
    %v192 = vstv %s76
    %v193 = vmul.f32 %v192, %v187
    %v194 = vtanh.pop %v193
    %v195 = vpack.c.bf16 %v194, %v194
    %v196 = vld [vmem:[#allocation9] sm:$0xf]
    %v197 = vld [vmem:[#allocation9 + $0x4] sm:$0xf]
    %v198 = vld [vmem:[#allocation9 + $0x8] sm:$0xf]
    %v199 = vld [vmem:[#allocation9 + $0xc] sm:$0xf]
    %v200 = vld [vmem:[#allocation9 + $0x10] sm:$0xf]
    %v201 = vld [vmem:[#allocation9 + $0x14] sm:$0xf]
    %v202 = vld [vmem:[#allocation9 + $0x18] sm:$0xf]
    %v203 = vld [vmem:[#allocation9 + $0x1c] sm:$0xf]
    %v204 = vld [vmem:[#allocation9 + $0x20] sm:$0xf]
    %v205 = vld [vmem:[#allocation9 + $0x24] sm:$0xf]
    %v206 = vld [vmem:[#allocation9 + $0x28] sm:$0xf]
    %v207 = vld [vmem:[#allocation9 + $0x2c] sm:$0xf]
    %v208 = vld [vmem:[#allocation9 + $0x30] sm:$0xf]
    %v209 = vld [vmem:[#allocation9 + $0x34] sm:$0xf]
    %v210 = vld [vmem:[#allocation9 + $0x38] sm:$0xf]
    %v211 = vld [vmem:[#allocation9 + $0x3c] sm:$0xf]
    %v212 = vld [vmem:[%s5] sm:$0x1]
    %v214 = vlaneseq
    %v215 = vshrl.u32 %v214, 7
    %v216 = vsub.s32 0, %v215
    %v217 = vrot.slane %v212, %v216
    %v235 = vunpack.c.l.b16 %v196
    %v236 = vunpack.c.l.b16 %v197
    %v237 = vunpack.c.l.b16 %v198
    %v238 = vunpack.c.l.b16 %v199
    %v239 = vunpack.c.l.b16 %v200
    %v240 = vunpack.c.l.b16 %v201
    %v241 = vunpack.c.l.b16 %v202
    %v242 = vunpack.c.l.b16 %v203
    %v243 = vunpack.c.l.b16 %v204
    %v244 = vunpack.c.l.b16 %v205
    %v245 = vunpack.c.l.b16 %v206
    %v246 = vunpack.c.l.b16 %v207
    %v247 = vunpack.c.l.b16 %v208
    %v248 = vunpack.c.l.b16 %v209
    %v249 = vunpack.c.l.b16 %v210
    %v250 = vunpack.c.l.b16 %v211
    %v251 = vpack.c.b16 %v236, %v235
    %v252 = vpack.c.b16 %v238, %v237
    %v253 = vpack.c.b16 %v240, %v239
    %v254 = vpack.c.b16 %v242, %v241
    %v255 = vpack.c.b16 %v244, %v243
    %v256 = vpack.c.b16 %v246, %v245
    %v257 = vpack.c.b16 %v248, %v247
    %v258 = vpack.c.b16 %v250, %v249
    %267 = vmatprep.subr.bf16.mxu0 0
    %268 = vmatpush1.bf16.msra.mxu0 %v258
    %269 = vmatprep.subr.bf16.mxu0 0
    %270 = vmatpush1.bf16.msra.mxu0 %v257
    %271 = vmatprep.subr.bf16.mxu0 0
    %272 = vmatpush1.bf16.msra.mxu0 %v256
    %273 = vmatprep.subr.bf16.mxu0 0
    %274 = vmatpush1.bf16.msra.mxu0 %v255
    %275 = vmatprep.subr.bf16.mxu0 0
    %276 = vmatpush1.bf16.msra.mxu0 %v254
    %277 = vmatprep.subr.bf16.mxu0 0
    %278 = vmatpush1.bf16.msra.mxu0 %v253
    %279 = vmatprep.subr.bf16.mxu0 0
    %280 = vmatpush1.bf16.msra.mxu0 %v252
    %281 = vmatprep.subr.bf16.mxu0 0
    %282 = vmatpush1.bf16.msra.mxu0 %v251
    %283 = vmatprep.subr.bf16.mxu0 0
    %284 = vmatpush2.bf16.msra.mxu0 0
    %285 = vmatprep.subr.bf16.mxu0 0
    %286 = vmatpush2.bf16.msra.mxu0 0
    %287 = vmatprep.subr.bf16.mxu0 0
    %288 = vmatpush2.bf16.msra.mxu0 0
    %289 = vmatprep.subr.bf16.mxu0 0
    %290 = vmatpush2.bf16.msra.mxu0 0
    %291 = vmatprep.subr.bf16.mxu0 0
    %292 = vmatpush2.bf16.msra.mxu0 0
    %293 = vmatprep.subr.bf16.mxu0 0
    %294 = vmatpush2.bf16.msra.mxu0 0
    %295 = vmatprep.subr.bf16.mxu0 0
    %296 = vmatpush2.bf16.msra.mxu0 0
    %297 = vmatprep.subr.bf16.mxu0 0
    %298 = vmatpush2.bf16.msra.mxu0 0
    %299 = vmatprep.mubr.bf16.mxu0 0
    %300 = vmatmul.mubr.bf16.gmra.mxu0 %v195
    %v301 = vpop.f32.mrf.mxu0
    %v302 = vadd.f32 %v217, %v301
    %v303 = vpop.f32.mrf.mxu0
    %v304 = vpop.f32.mrf.mxu0
    %v305 = vpop.f32.mrf.mxu0
    %306 = vdwg.mxu0
    %v307 = vadd.f32 %v302, %v79
    %v308 = vstv %s78
    %v309 = vmul.f32 %v308, %v307
    %v310 = vtanh.pop %v309
    %311 = vst [vmem:[#allocation10] sm:$0xff] %v310
    // Predicated region
    $region42: #{tpu_custom_call.1} parent=1 // pred_check
      _
    $region43: #{tpu_custom_call.1} parent=1 // pred_check_branch
      %313 = sbr.rel (0) target = $region45
    $region44: #{tpu_custom_call.1} parent=1 // pred_region
      %s315 = ssub.s32 128, 128
      %316 = vsyncadd [#allocation4], %s315
      %s318 = sshll.u32 [#allocation10], 4
      %s319 = int_to_ptr.vmem [resolvable:$true] %s318
      %321 = dma.vmem_to_hbm [thread:$0]  %s319, 128, %s6, [#allocation4]
    $region45: #{tpu_custom_call.1} parent=1 // pred_fallthru
      _
    // Predicated region
    $region46: #{tpu_custom_call.1} parent=1 // pred_check
      _
    $region47: #{tpu_custom_call.1} parent=1 // pred_check_branch
      %323 = sbr.rel (0) target = $region49
    $region48: #{tpu_custom_call.1} parent=1 // pred_region
      %324 = dma.done [#allocation4], 128
    $region49: #{tpu_custom_call.1} parent=1 // pred_fallthru
      _
    %325 = vsyncpa [#allocation3], 1
    %326 = vsyncpa [#allocation8], 1
    %327 = vsyncpa [#allocation4], 1
    %328 = vsyncpa [#allocation5], 1

// kernel: tpu_custom_call.1
$region0: #{tpu_custom_call.1}
  #allocation0 [shape = 'u32[]', space=smem, size = 0x4, offset = 0x4, fixed_abs, tag = 'smem constant byte address 0x4 - core index']
  #allocation1 [shape = 'u32[144,128]{1,0:T(1,128)}', space=vmem, size = 0x12000, scoped, tag = 'internal scratch']
  %s0 = inlined_call_operand.hbm [shape: f32[2], index: 0, kind: input, shape index: {}]
  %s1 = inlined_call_operand.hbm [shape: f32[8,128], index: 1, kind: input, shape index: {}]
  %s2 = inlined_call_operand.hbm [shape: bf16[128,128], index: 2, kind: input, shape index: {}]
  %s3 = inlined_call_operand.vmem [shape: f32[1,128], index: 3, kind: input, shape index: {}]
  %s4 = inlined_call_operand.hbm [shape: bf16[128,128], index: 4, kind: input, shape index: {}]
  %s5 = inlined_call_operand.vmem [shape: f32[1,128], index: 5, kind: input, shape index: {}]
  %s6 = inlined_call_operand.hbm [shape: f32[8,128], index: 6, kind: output, shape index: {}]
  %s7 = sld [smem:[#allocation0]]
  $region50: #{tpu_custom_call.1} parent=0
    _
  %s9 = ssub.s32 1, %s7
  %s10 = scalar_select 0, %s9, %s7
  $region1: #{tpu_custom_call.1} parent=0
    #allocation2 [shape = 'u8[512]{0}', space=smem, size = 0x200, scoped, tag = 'input window, operand 0, single buffered']
    #allocation3 [shape = 's32[1]{0}', space=sflag, size = 0x4, scoped, tag = 'scoped memory for tpu_custom_call.1']
    #allocation4 [shape = 's32[1]{0}', space=sflag, size = 0x4, scoped, tag = 'scoped memory for tpu_custom_call.1']
    #allocation5 [shape = 's32[1]{0}', space=sflag, size = 0x4, scoped, tag = 'scoped memory for tpu_custom_call.1']
    #allocation6 [shape = 'u8[4096]{0}', space=vmem, size = 0x1000, scoped, tag = 'input window, operand 1, single buffered']
    #allocation7 [shape = 'u8[32768]{0}', space=vmem, size = 0x8000, scoped, tag = 'input window, operand 2, single buffered']
    #allocation8 [shape = 's32[1]{0}', space=sflag, size = 0x4, scoped, tag = 'scoped memory for tpu_custom_call.1']
    #allocation9 [shape = 'u8[32768]{0}', space=vmem, size = 0x8000, scoped, tag = 'input window, operand 4, single buffered']
    #allocation10 [shape = 'u8[4096]{0}', space=vmem, size = 0x1000, scoped, tag = 'output window, operand 0, single buffered']
    %11 = vsyncpa [#allocation5], 0
    %12 = vsyncpa [#allocation3], 0
    %13 = vsyncpa [#allocation8], 0
    %14 = vsyncpa [#allocation4], 0
    // Predicated region
    $region2: #{tpu_custom_call.1} parent=1 // pred_check
      _
    $region3: #{tpu_custom_call.1} parent=1 // pred_check_branch
      %16 = sbr.rel (0) target = $region5
    $region4: #{tpu_custom_call.1} parent=1 // pred_region
      %s18 = ssub.s32 16, 16
      %19 = vsyncadd [#allocation5], %s18
      %22 = dma.hbm_to_smem %s0, 16, [#allocation2], [#allocation5]
    $region5: #{tpu_custom_call.1} parent=1 // pred_fallthru
      _
    // Predicated region
    $region6: #{tpu_custom_call.1} parent=1 // pred_check
      _
    $region7: #{tpu_custom_call.1} parent=1 // pred_check_branch
      %24 = sbr.rel (0) target = $region9
    $region8: #{tpu_custom_call.1} parent=1 // pred_region
      %s26 = ssub.s32 128, 128
      %27 = vsyncadd [#allocation3], %s26
      %s29 = sshll.u32 [#allocation6], 4
      %s30 = int_to_ptr.vmem [resolvable:$true] %s29
      %32 = dma.hbm_to_vmem [thread:$0]  %s1, 128, %s30, [#allocation3]
    $region9: #{tpu_custom_call.1} parent=1 // pred_fallthru
      _
    // Predicated region
    $region10: #{tpu_custom_call.1} parent=1 // pred_check
      _
    $region11: #{tpu_custom_call.1} parent=1 // pred_check_branch
      %34 = sbr.rel (0) target = $region13
    $region12: #{tpu_custom_call.1} parent=1 // pred_region
      %s36 = ssub.s32 1024, 1024
      %37 = vsyncadd [#allocation8], %s36
      %s38 = sshll.u32 [#allocation7], 4
      %s39 = int_to_ptr.vmem [resolvable:$true] %s38
      %44 = dma.hbm_to_vmem [thread:$0]  %s2, 1024, %s39, [#allocation8], 64, 64, 4
    $region13: #{tpu_custom_call.1} parent=1 // pred_fallthru
      _
    // Predicated region
    $region14: #{tpu_custom_call.1} parent=1 // pred_check
      _
    $region15: #{tpu_custom_call.1} parent=1 // pred_check_branch
      %46 = sbr.rel (0) target = $region17
    $region16: #{tpu_custom_call.1} parent=1 // pred_region
      _
    $region17: #{tpu_custom_call.1} parent=1 // pred_fallthru
      _
    // Predicated region
    $region18: #{tpu_custom_call.1} parent=1 // pred_check
      _
    $region19: #{tpu_custom_call.1} parent=1 // pred_check_branch
      %48 = sbr.rel (0) target = $region21
    $region20: #{tpu_custom_call.1} parent=1 // pred_region
      %s50 = ssub.s32 1024, 1024
      %51 = vsyncadd [#allocation8], %s50
      %s52 = sshll.u32 [#allocation9], 4
      %s53 = int_to_ptr.vmem [resolvable:$true] %s52
      %58 = dma.hbm_to_vmem [thread:$0]  %s4, 1024, %s53, [#allocation8], 64, 64, 4
    $region21: #{tpu_custom_call.1} parent=1 // pred_fallthru
      _
    // Predicated region
    $region22: #{tpu_custom_call.1} parent=1 // pred_check
      _
    $region23: #{tpu_custom_call.1} parent=1 // pred_check_branch
      %60 = sbr.rel (0) target = $region25
    $region24: #{tpu_custom_call.1} parent=1 // pred_region
      _
    $region25: #{tpu_custom_call.1} parent=1 // pred_fallthru
      _
    // Predicated region
    $region26: #{tpu_custom_call.1} parent=1 // pred_check
      _
    $region27: #{tpu_custom_call.1} parent=1 // pred_check_branch
      %62 = sbr.rel (0) target = $region29
    $region28: #{tpu_custom_call.1} parent=1 // pred_region
      %63 = dma.done [#allocation5], 16
    $region29: #{tpu_custom_call.1} parent=1 // pred_fallthru
      _
    // Predicated region
    $region30: #{tpu_custom_call.1} parent=1 // pred_check
      _
    $region31: #{tpu_custom_call.1} parent=1 // pred_check_branch
      %65 = sbr.rel (0) target = $region33
    $region32: #{tpu_custom_call.1} parent=1 // pred_region
      %66 = dma.done [#allocation3], 128
    $region33: #{tpu_custom_call.1} parent=1 // pred_fallthru
      _
    // Predicated region
    $region34: #{tpu_custom_call.1} parent=1 // pred_check
      _
    $region35: #{tpu_custom_call.1} parent=1 // pred_check_branch
      %68 = sbr.rel (0) target = $region37
    $region36: #{tpu_custom_call.1} parent=1 // pred_region
      %69 = dma.done [#allocation8], 1024
    $region37: #{tpu_custom_call.1} parent=1 // pred_fallthru
      _
    // Predicated region
    $region38: #{tpu_custom_call.1} parent=1 // pred_check
      _
    $region39: #{tpu_custom_call.1} parent=1 // pred_check_branch
      %71 = sbr.rel (0) target = $region41
    $region40: #{tpu_custom_call.1} parent=1 // pred_region
      %72 = dma.done [#allocation8], 1024
    $region41: #{tpu_custom_call.1} parent=1 // pred_fallthru
      _
    %73 = sfence
    %s75 = sld [smem:[#allocation2]]
    %s76 = smul.f32 %s75, 10.0
    %s77 = sld [smem:[#allocation2 + $0x1]]
    %s78 = smul.f32 %s77, 10.0
    %v79 = vld [vmem:[#allocation6] sm:$0xff]
    %v80 = vpack.c.bf16 %v79, %v79
    %v81 = vld [vmem:[#allocation7] sm:$0xf]
    %v82 = vld [vmem:[#allocation7 + $0x4] sm:$0xf]
    %v83 = vld [vmem:[#allocation7 + $0x8] sm:$0xf]
    %v84 = vld [vmem:[#allocation7 + $0xc] sm:$0xf]
    %v85 = vld [vmem:[#allocation7 + $0x10] sm:$0xf]
    %v86 = vld [vmem:[#allocation7 + $0x14] sm:$0xf]
    %v87 = vld [vmem:[#allocation7 + $0x18] sm:$0xf]
    %v88 = vld [vmem:[#allocation7 + $0x1c] sm:$0xf]
    %v89 = vld [vmem:[#allocation7 + $0x20] sm:$0xf]
    %v90 = vld [vmem:[#allocation7 + $0x24] sm:$0xf]
    %v91 = vld [vmem:[#allocation7 + $0x28] sm:$0xf]
    %v92 = vld [vmem:[#allocation7 + $0x2c] sm:$0xf]
    %v93 = vld [vmem:[#allocation7 + $0x30] sm:$0xf]
    %v94 = vld [vmem:[#allocation7 + $0x34] sm:$0xf]
    %v95 = vld [vmem:[#allocation7 + $0x38] sm:$0xf]
    %v96 = vld [vmem:[#allocation7 + $0x3c] sm:$0xf]
    %v97 = vld [vmem:[%s3] sm:$0x1]
    %v99 = vlaneseq
    %v100 = vshrl.u32 %v99, 7
    %v101 = vsub.s32 0, %v100
    %v102 = vrot.slane %v97, %v101
    %v120 = vunpack.c.l.b16 %v81
    %v121 = vunpack.c.l.b16 %v82
    %v122 = vunpack.c.l.b16 %v83
    %v123 = vunpack.c.l.b16 %v84
    %v124 = vunpack.c.l.b16 %v85
    %v125 = vunpack.c.l.b16 %v86
    %v126 = vunpack.c.l.b16 %v87
    %v127 = vunpack.c.l.b16 %v88
    %v128 = vunpack.c.l.b16 %v89
    %v129 = vunpack.c.l.b16 %v90
    %v130 = vunpack.c.l.b16 %v91
    %v131 = vunpack.c.l.b16 %v92
    %v132 = vunpack.c.l.b16 %v93
    %v133 = vunpack.c.l.b16 %v94
    %v134 = vunpack.c.l.b16 %v95
    %v135 = vunpack.c.l.b16 %v96
    %v136 = vpack.c.b16 %v121, %v120
    %v137 = vpack.c.b16 %v123, %v122
    %v138 = vpack.c.b16 %v125, %v124
    %v139 = vpack.c.b16 %v127, %v126
    %v140 = vpack.c.b16 %v129, %v128
    %v141 = vpack.c.b16 %v131, %v130
    %v142 = vpack.c.b16 %v133, %v132
    %v143 = vpack.c.b16 %v135, %v134
    %152 = vmatprep.subr.bf16.mxu0 0
    %153 = vmatpush1.bf16.msra.mxu0 %v143
    %154 = vmatprep.subr.bf16.mxu0 0
    %155 = vmatpush1.bf16.msra.mxu0 %v142
    %156 = vmatprep.subr.bf16.mxu0 0
    %157 = vmatpush1.bf16.msra.mxu0 %v141
    %158 = vmatprep.subr.bf16.mxu0 0
    %159 = vmatpush1.bf16.msra.mxu0 %v140
    %160 = vmatprep.subr.bf16.mxu0 0
    %161 = vmatpush1.bf16.msra.mxu0 %v139
    %162 = vmatprep.subr.bf16.mxu0 0
    %163 = vmatpush1.bf16.msra.mxu0 %v138
    %164 = vmatprep.subr.bf16.mxu0 0
    %165 = vmatpush1.bf16.msra.mxu0 %v137
    %166 = vmatprep.subr.bf16.mxu0 0
    %167 = vmatpush1.bf16.msra.mxu0 %v136
    %168 = vmatprep.subr.bf16.mxu0 0
    %169 = vmatpush2.bf16.msra.mxu0 0
    %170 = vmatprep.subr.bf16.mxu0 0
    %171 = vmatpush2.bf16.msra.mxu0 0
    %172 = vmatprep.subr.bf16.mxu0 0
    %173 = vmatpush2.bf16.msra.mxu0 0
    %174 = vmatprep.subr.bf16.mxu0 0
    %175 = vmatpush2.bf16.msra.mxu0 0
    %176 = vmatprep.subr.bf16.mxu0 0
    %177 = vmatpush2.bf16.msra.mxu0 0
    %178 = vmatprep.subr.bf16.mxu0 0
    %179 = vmatpush2.bf16.msra.mxu0 0
    %180 = vmatprep.subr.bf16.mxu0 0
    %181 = vmatpush2.bf16.msra.mxu0 0
    %182 = vmatprep.subr.bf16.mxu0 0
    %183 = vmatpush2.bf16.msra.mxu0 0
    %184 = vmatprep.mubr.bf16.mxu0 0
    %185 = vmatmul.mubr.bf16.gmra.mxu0 %v80
    %v186 = vpop.f32.mrf.mxu0
    %v187 = vadd.f32 %v102, %v186
    %v188 = vpop.f32.mrf.mxu0
    %v189 = vpop.f32.mrf.mxu0
    %v190 = vpop.f32.mrf.mxu0
    %191 = vdwg.mxu0
    %v192 = vstv %s76
    %v193 = vmul.f32 %v192, %v187
    %v194 = vtanh.pop %v193
    %v195 = vpack.c.bf16 %v194, %v194
    %v196 = vld [vmem:[#allocation9] sm:$0xf]
    %v197 = vld [vmem:[#allocation9 + $0x4] sm:$0xf]
    %v198 = vld [vmem:[#allocation9 + $0x8] sm:$0xf]
    %v199 = vld [vmem:[#allocation9 + $0xc] sm:$0xf]
    %v200 = vld [vmem:[#allocation9 + $0x10] sm:$0xf]
    %v201 = vld [vmem:[#allocation9 + $0x14] sm:$0xf]
    %v202 = vld [vmem:[#allocation9 + $0x18] sm:$0xf]
    %v203 = vld [vmem:[#allocation9 + $0x1c] sm:$0xf]
    %v204 = vld [vmem:[#allocation9 + $0x20] sm:$0xf]
    %v205 = vld [vmem:[#allocation9 + $0x24] sm:$0xf]
    %v206 = vld [vmem:[#allocation9 + $0x28] sm:$0xf]
    %v207 = vld [vmem:[#allocation9 + $0x2c] sm:$0xf]
    %v208 = vld [vmem:[#allocation9 + $0x30] sm:$0xf]
    %v209 = vld [vmem:[#allocation9 + $0x34] sm:$0xf]
    %v210 = vld [vmem:[#allocation9 + $0x38] sm:$0xf]
    %v211 = vld [vmem:[#allocation9 + $0x3c] sm:$0xf]
    %v212 = vld [vmem:[%s5] sm:$0x1]
    %v214 = vlaneseq
    %v215 = vshrl.u32 %v214, 7
    %v216 = vsub.s32 0, %v215
    %v217 = vrot.slane %v212, %v216
    %v235 = vunpack.c.l.b16 %v196
    %v236 = vunpack.c.l.b16 %v197
    %v237 = vunpack.c.l.b16 %v198
    %v238 = vunpack.c.l.b16 %v199
    %v239 = vunpack.c.l.b16 %v200
    %v240 = vunpack.c.l.b16 %v201
    %v241 = vunpack.c.l.b16 %v202
    %v242 = vunpack.c.l.b16 %v203
    %v243 = vunpack.c.l.b16 %v204
    %v244 = vunpack.c.l.b16 %v205
    %v245 = vunpack.c.l.b16 %v206
    %v246 = vunpack.c.l.b16 %v207
    %v247 = vunpack.c.l.b16 %v208
    %v248 = vunpack.c.l.b16 %v209
    %v249 = vunpack.c.l.b16 %v210
    %v250 = vunpack.c.l.b16 %v211
    %v251 = vpack.c.b16 %v236, %v235
    %v252 = vpack.c.b16 %v238, %v237
    %v253 = vpack.c.b16 %v240, %v239
    %v254 = vpack.c.b16 %v242, %v241
    %v255 = vpack.c.b16 %v244, %v243
    %v256 = vpack.c.b16 %v246, %v245
    %v257 = vpack.c.b16 %v248, %v247
    %v258 = vpack.c.b16 %v250, %v249
    %267 = vmatprep.subr.bf16.mxu0 0
    %268 = vmatpush1.bf16.msra.mxu0 %v258
    %269 = vmatprep.subr.bf16.mxu0 0
    %270 = vmatpush1.bf16.msra.mxu0 %v257
    %271 = vmatprep.subr.bf16.mxu0 0
    %272 = vmatpush1.bf16.msra.mxu0 %v256
    %273 = vmatprep.subr.bf16.mxu0 0
    %274 = vmatpush1.bf16.msra.mxu0 %v255
    %275 = vmatprep.subr.bf16.mxu0 0
    %276 = vmatpush1.bf16.msra.mxu0 %v254
    %277 = vmatprep.subr.bf16.mxu0 0
    %278 = vmatpush1.bf16.msra.mxu0 %v253
    %279 = vmatprep.subr.bf16.mxu0 0
    %280 = vmatpush1.bf16.msra.mxu0 %v252
    %281 = vmatprep.subr.bf16.mxu0 0
    %282 = vmatpush1.bf16.msra.mxu0 %v251
    %283 = vmatprep.subr.bf16.mxu0 0
    %284 = vmatpush2.bf16.msra.mxu0 0
    %285 = vmatprep.subr.bf16.mxu0 0
    %286 = vmatpush2.bf16.msra.mxu0 0
    %287 = vmatprep.subr.bf16.mxu0 0
    %288 = vmatpush2.bf16.msra.mxu0 0
    %289 = vmatprep.subr.bf16.mxu0 0
    %290 = vmatpush2.bf16.msra.mxu0 0
    %291 = vmatprep.subr.bf16.mxu0 0
    %292 = vmatpush2.bf16.msra.mxu0 0
    %293 = vmatprep.subr.bf16.mxu0 0
    %294 = vmatpush2.bf16.msra.mxu0 0
    %295 = vmatprep.subr.bf16.mxu0 0
    %296 = vmatpush2.bf16.msra.mxu0 0
    %297 = vmatprep.subr.bf16.mxu0 0
    %298 = vmatpush2.bf16.msra.mxu0 0
    %299 = vmatprep.mubr.bf16.mxu0 0
    %300 = vmatmul.mubr.bf16.gmra.mxu0 %v195
    %v301 = vpop.f32.mrf.mxu0
    %v302 = vadd.f32 %v217, %v301
    %v303 = vpop.f32.mrf.mxu0
    %v304 = vpop.f32.mrf.mxu0
    %v305 = vpop.f32.mrf.mxu0
    %306 = vdwg.mxu0
    %v307 = vadd.f32 %v302, %v79
    %v308 = vstv %s78
    %v309 = vmul.f32 %v308, %v307
    %v310 = vtanh.pop %v309
    %311 = vst [vmem:[#allocation10] sm:$0xff] %v310
    // Predicated region
    $region42: #{tpu_custom_call.1} parent=1 // pred_check
      _
    $region43: #{tpu_custom_call.1} parent=1 // pred_check_branch
      %313 = sbr.rel (0) target = $region45
    $region44: #{tpu_custom_call.1} parent=1 // pred_region
      %s315 = ssub.s32 128, 128
      %316 = vsyncadd [#allocation4], %s315
      %s318 = sshll.u32 [#allocation10], 4
      %s319 = int_to_ptr.vmem [resolvable:$true] %s318
      %321 = dma.vmem_to_hbm [thread:$0]  %s319, 128, %s6, [#allocation4]
    $region45: #{tpu_custom_call.1} parent=1 // pred_fallthru
      _
    // Predicated region
    $region46: #{tpu_custom_call.1} parent=1 // pred_check
      _
    $region47: #{tpu_custom_call.1} parent=1 // pred_check_branch
      %323 = sbr.rel (0) target = $region49
    $region48: #{tpu_custom_call.1} parent=1 // pred_region
      %324 = dma.done [#allocation4], 128
    $region49: #{tpu_custom_call.1} parent=1 // pred_fallthru
      _
    %325 = vsyncpa [#allocation3], 1
    %326 = vsyncpa [#allocation8], 1
    %327 = vsyncpa [#allocation4], 1
    %328 = vsyncpa [#allocation5], 1

</llo_original>
